<compile_context>
chip_gen: v5e
topology: v5e:2x2
jax: 0.10.0
libtpu: 0.0.40
codegen_flags: <defaults>
</compile_context>

<pallas_src>
import functools

import jax
import jax.numpy as jnp
from jax.experimental import pallas as pl
from jax.experimental.pallas import tpu as pltpu


def _cdiv(a, b):
    return (a + b - 1) // b


def _round_up(a, b):
    return _cdiv(a, b) * b


def _vmem_plan():
    """Returns (input-tile byte budget, scoped vmem_limit_bytes), generation aware."""
    phys = None
    try:
        info = pltpu.get_tpu_info()
        phys = getattr(info, "vmem_capacity_bytes", None)
    except Exception:
        phys = None
    if phys is not None and phys >= (100 << 20):     # v5e / v6e: 128 MiB physical VMEM
        return 24 << 20, 80 << 20
    # v7x (64 MiB physical) or unknown: stay conservative.
    return 12 << 20, 44 << 20


def _image_ce_hist_kernel(x_ref, t_ref, cnt_ref, s_ref, *,
                          n_pixels, tile_pixels, blocks_per_split):
    """Accumulate per-class (pixel count, sum of picked log-prob) for one image."""
    s = pl.program_id(1)          # core-split index along the pixel axis
    p = pl.program_id(2)          # pixel-tile index within the split

    @pl.when(p == 0)
    def _():
        cnt_ref[...] = jnp.zeros(cnt_ref.shape, cnt_ref.dtype)
        s_ref[...] = jnp.zeros(s_ref.shape, s_ref.dtype)

    x = x_ref[0].astype(jnp.float32)    # (C, Tp): classes on sublanes, pixels on lanes
    t = t_ref[0]                        # (1, Tp): int32 labels
    C, Tp = x.shape

    # Global pixel index of each lane.  The last block may overrun P (no wrapper
    # pad) and clamped/duplicated blocks of the core split must contribute
    # nothing, so every lane is validity-masked here.
    blk = s * blocks_per_split + p
    lane = blk * tile_pixels + jax.lax.broadcasted_iota(jnp.int32, (1, Tp), 1)
    lane_ok = lane < n_pixels                                             # (1, Tp)

    # ignore_index (255) / anything outside [0, C) / OOB tail lanes are dropped,
    # matching nn.NLLLoss2d(ignore_index=255) + np.histogram range clipping.
    t_m = jnp.where(lane_ok & (t >= 0) & (t < C), t, jnp.int32(-1))       # (1, Tp)
    valid = t_m >= 0                                                      # (1, Tp)

    cls = jax.lax.broadcasted_iota(jnp.int32, (C, Tp), 0)
    onehot = t_m == cls                                                   # (C, Tp)
    onehot_f = onehot.astype(jnp.float32)

    # Picked logit x[label_p, p] via a sublane select+reduce (no (C,Tp)
    # log-softmax materialized).
    picked = jnp.sum(jnp.where(onehot, x, 0.0), axis=0, keepdims=True)    # (1, Tp)

    # Per-pixel log-softmax normalizer; garbage tail lanes are killed by the
    # select below (select does not propagate NaN/Inf from the dead branch).
    m = jnp.max(x, axis=0, keepdims=True)                                 # (1, Tp)
    z = jnp.sum(jnp.exp(x - m), axis=0, keepdims=True)                    # (1, Tp)
    u = jnp.where(valid, picked - m - jnp.log(z), 0.0)                    # (1, Tp)

    cnt_ref[...] += jnp.sum(onehot_f, axis=1, keepdims=True).reshape(cnt_ref.shape)
    s_ref[...] += jnp.sum(onehot_f * u, axis=1, keepdims=True).reshape(s_ref.shape)


def image_based_ce_loss(inputs, targets, *, num_classes, upper_bound=1.0,
                        norm=False, max_tile_pixels=None):
    """inputs: (N, C, H, W) float logits; targets: (N, H, W) int labels (255=ignore)."""
    N, C, H, W = inputs.shape
    assert C == num_classes
    P = H * W

    # Free reshapes (no transpose, no pad, no dtype change): pixels land on lanes.
    x = inputs.reshape(N, C, P)
    t = targets.reshape(N, 1, P).astype(jnp.int32)

    # --- VMEM-budgeted pixel tile (multiple of 128) --------------------------
    in_bytes = jnp.dtype(inputs.dtype).itemsize
    io_budget, vmem_limit = _vmem_plan()
    # Double-buffered logits + targets, plus headroom for the f32 intermediates
    # Mosaic materializes around the reductions.
    per_pixel = 2 * (C * in_bytes + 4) + 3 * C * 4
    Tp = min(io_budget // per_pixel, 32768) // 128 * 128
    Tp = max(128, min(Tp, _round_up(P, 128)))
    if max_tile_pixels is not None:
        Tp = max(128, min(Tp, max_tile_pixels // 128 * 128))

    n_blk = _cdiv(P, Tp)
    # Core split of the pixel (reduction) axis so both v7x TensorCores are busy
    # when the batch alone cannot fill them.  Raw (counts, S) partials are merged
    # in the wrapper because the weight math is nonlinear.
    split = 2 if (N == 1 and n_blk >= 2) else 1
    npps = _cdiv(n_blk, split)

    def pix_map(i, s, p):
        # Clamp so fully-out-of-range blocks of the core split re-read the last
        # real block; their lanes are masked to zero contribution in-kernel.
        return (i, 0, jnp.minimum(s * npps + p, n_blk - 1))

    def out_map(i, s, p):
        return (i, s, 0, 0)

    kernel = functools.partial(_image_ce_hist_kernel, n_pixels=P,
                               tile_pixels=Tp, blocks_per_split=npps)

    counts, picked_sum = pl.pallas_call(
        kernel,
        out_shape=(jax.ShapeDtypeStruct((N, split, C, 1), jnp.float32),
                   jax.ShapeDtypeStruct((N, split, C, 1), jnp.float32)),
        grid_spec=pltpu.PrefetchScalarGridSpec(
            num_scalar_prefetch=0,
            grid=(N, split, npps),
            in_specs=[
                pl.BlockSpec((1, C, Tp), pix_map),
                pl.BlockSpec((1, 1, Tp), pix_map),
            ],
            out_specs=(
                pl.BlockSpec((1, 1, C, 1), out_map),
                pl.BlockSpec((1, 1, C, 1), out_map),
            ),
        ),
        compiler_params=pltpu.CompilerParams(
            dimension_semantics=("parallel", "parallel", "arbitrary"),
            vmem_limit_bytes=vmem_limit),
    )(x, t)

    # --- per-image histogram weights + weighted NLL (tiny, plain XLA) -------
    counts = counts.reshape(N, split, C).sum(axis=1)           # (N, C)
    s_sum = picked_sum.reshape(N, split, C).sum(axis=1)        # (N, C)

    total = jnp.sum(counts, axis=1, keepdims=True)             # (N, 1)
    hist = counts / jnp.where(total > 0.0, total, 1.0)
    nz = hist != 0.0
    safe_hist = jnp.where(nz, hist, 1.0)
    # Absent classes get weight 1 (their counts/S are 0, so this reproduces the
    # PyTorch gather semantics without 0*inf NaNs in the norm path).
    if norm:
        w = jnp.where(nz, upper_bound / safe_hist, 0.0) + 1.0
    else:
        w = jnp.where(nz, upper_bound * (1.0 - hist), 0.0) + 1.0

    num = jnp.sum(w * s_sum, axis=1)                           # (N,)
    den = jnp.sum(w * counts, axis=1)                          # (N,)
    # All-ignored image -> 0 instead of NaN (documented divergence from PyTorch).
    loss_i = jnp.where(den > 0.0, -(num / jnp.where(den > 0.0, den, 1.0)), 0.0)
    return jnp.sum(loss_i)


def _reference_loss(inputs, targets, num_classes, upper_bound=1.0, norm=False):
    """Pure-JAX re-implementation of the PyTorch forward for validation."""
    N, C, H, W = inputs.shape
    total = jnp.float32(0.0)
    for i in range(N):
        ti = targets[i].reshape(-1).astype(jnp.int32)
        valid = (ti >= 0) & (ti < num_classes)
        counts = jnp.stack(
            [jnp.sum(((ti == c) & valid).astype(jnp.float32))
             for c in range(num_classes)])
        hist = counts / jnp.sum(counts)
        nz = hist != 0.0
        safe_hist = jnp.where(nz, hist, 1.0)
        if norm:
            w = jnp.where(nz, upper_bound / safe_hist, 0.0) + 1.0
        else:
            w = jnp.where(nz, upper_bound * (1.0 - hist), 0.0) + 1.0
        ls = jax.nn.log_softmax(inputs[i].astype(jnp.float32), axis=0)
        ls = ls.reshape(num_classes, -1)
        tc = jnp.where(valid, ti, 0)
        picked = ls[tc, jnp.arange(ti.shape[0])]
        pw = jnp.where(valid, w[tc], 0.0)
        total = total + (-(jnp.sum(pw * picked) / jnp.sum(pw)))
    return total


if __name__ == "__main__":
    key = jax.random.PRNGKey(0)
    k1, k2, k3, k4, k5 = jax.random.split(key, 5)

    # Case 1: standard small shape (exact tiling, ignore_index pixels present).
    N, C, H, W = 2, 4, 16, 16
    x = jax.random.normal(k1, (N, C, H, W), jnp.float32)
    t = jax.random.randint(k2, (N, H, W), 0, C, jnp.int32)
    ign = jax.random.uniform(k3, (N, H, W)) < 0.1
    t = jnp.where(ign, jnp.int32(255), t)

    loss = jax.block_until_ready(image_based_ce_loss(x, t, num_classes=C))
    ref = _reference_loss(x, t, C)
    assert jnp.isfinite(loss), loss
    assert jnp.allclose(loss, ref, rtol=1e-4, atol=1e-4), (float(loss), float(ref))

    # Case 2: N=1 with a forced small tile -> exercises the unpadded masked tail,
    # the core split of the pixel axis and the clamped out-of-range block.
    N2, H2, W2 = 1, 13, 23                      # P = 299, not a multiple of 128
    x2 = jax.random.normal(k4, (N2, C, H2, W2), jnp.float32)
    t2 = jax.random.randint(k5, (N2, H2, W2), 0, C, jnp.int32)
    loss2 = jax.block_until_ready(
        image_based_ce_loss(x2, t2, num_classes=C, max_tile_pixels=128))
    ref2 = _reference_loss(x2, t2, C)
    assert jnp.isfinite(loss2), loss2
    assert jnp.allclose(loss2, ref2, rtol=1e-4, atol=1e-4), (float(loss2), float(ref2))

    print("KERNEL_OK")
</pallas_src>

<mosaic_0001>
module attributes {stable_mosaic.version = 11 : i64} {
  func.func @_image_ce_hist_kernel(%arg0: i32, %arg1: i32, %arg2: i32, %arg3: memref<1x4x256xf32, #tpu.memory_space<vmem>>, %arg4: memref<1x1x256xi32, #tpu.memory_space<vmem>>, %arg5: memref<1x1x4x1xf32, #tpu.memory_space<vmem>>, %arg6: memref<1x1x4x1xf32, #tpu.memory_space<vmem>>) attributes {dimension_semantics = [#tpu.dimension_semantics<parallel>, #tpu.dimension_semantics<parallel>, #tpu.dimension_semantics<arbitrary>], iteration_bounds = array<i64: 2, 1, 1>, scalar_prefetch = 0 : i64, scratch_operands = 0 : i64, tpu.core_type = #tpu.core_type<tc>, window_params = [{transform_indices = @transform_0, window_bounds = array<i64: 1, 4, 256>}, {transform_indices = @transform_1, window_bounds = array<i64: 1, 1, 256>}, {transform_indices = @transform_2, window_bounds = array<i64: 1, 1, 4, 1>}, {transform_indices = @transform_3, window_bounds = array<i64: 1, 1, 4, 1>}]} {
    %c0_i32 = arith.constant 0 : i32
    %0 = arith.cmpi eq, %arg2, %c0_i32 : i32
    %1 = arith.extui %0 : i1 to i32
    %c0_i32_0 = arith.constant 0 : i32
    %2 = arith.cmpi ne, %1, %c0_i32_0 : i32
    scf.if %2 {
      %cst_31 = arith.constant 0.000000e+00 : f32
      %60 = vector.broadcast %cst_31 : f32 to vector<1x1x4x1xf32>
      %c0_32 = arith.constant 0 : index
      %c0_33 = arith.constant 0 : index
      %c0_34 = arith.constant 0 : index
      %c0_35 = arith.constant 0 : index
      %61 = vector.load %arg5[%c0_32, %c0_33, %c0_34, %c0_35] : memref<1x1x4x1xf32, #tpu.memory_space<vmem>>, vector<1x1x4x1xf32>
      tpu.vector_store %arg5[%c0_32, %c0_33, %c0_34, %c0_35], %60 {strides = array<i32>} : memref<1x1x4x1xf32, #tpu.memory_space<vmem>>, vector<1x1x4x1xf32>,
      %cst_36 = arith.constant 0.000000e+00 : f32
      %62 = vector.broadcast %cst_36 : f32 to vector<1x1x4x1xf32>
      %c0_37 = arith.constant 0 : index
      %c0_38 = arith.constant 0 : index
      %c0_39 = arith.constant 0 : index
      %c0_40 = arith.constant 0 : index
      %63 = vector.load %arg6[%c0_37, %c0_38, %c0_39, %c0_40] : memref<1x1x4x1xf32, #tpu.memory_space<vmem>>, vector<1x1x4x1xf32>
      tpu.vector_store %arg6[%c0_37, %c0_38, %c0_39, %c0_40], %62 {strides = array<i32>} : memref<1x1x4x1xf32, #tpu.memory_space<vmem>>, vector<1x1x4x1xf32>,
    } else {
    }
    %c0 = arith.constant 0 : index
    %c0_1 = arith.constant 0 : index
    %c0_2 = arith.constant 0 : index
    %3 = vector.load %arg3[%c0, %c0_1, %c0_2] : memref<1x4x256xf32, #tpu.memory_space<vmem>>, vector<1x4x256xf32>
    %4 = vector.shape_cast %3 : vector<1x4x256xf32> to vector<4x256xf32>
    %c0_3 = arith.constant 0 : index
    %c0_4 = arith.constant 0 : index
    %c0_5 = arith.constant 0 : index
    %5 = vector.load %arg4[%c0_3, %c0_4, %c0_5] : memref<1x1x256xi32, #tpu.memory_space<vmem>>, vector<1x1x256xi32>
    %6 = vector.shape_cast %5 : vector<1x1x256xi32> to vector<1x256xi32>
    %c1_i32 = arith.constant 1 : i32
    %7 = arith.muli %arg1, %c1_i32 : i32
    %8 = arith.addi %7, %arg2 : i32
    %c256_i32 = arith.constant 256 : i32
    %9 = arith.muli %8, %c256_i32 : i32
    %10 = tpu.iota {dimensions = array<i32: 1>} : vector<1x256xi32>
    %11 = vector.broadcast %9 : i32 to vector<1x256xi32>
    %12 = arith.addi %11, %10 : vector<1x256xi32>
    %c256_i32_6 = arith.constant 256 : i32
    %13 = vector.broadcast %c256_i32_6 : i32 to vector<1x256xi32>
    %14 = arith.cmpi slt, %12, %13 : vector<1x256xi32>
    %c0_i32_7 = arith.constant 0 : i32
    %15 = vector.broadcast %c0_i32_7 : i32 to vector<1x256xi32>
    %16 = arith.cmpi sge, %6, %15 : vector<1x256xi32>
    %17 = arith.andi %14, %16 : vector<1x256xi1>
    %c4_i32 = arith.constant 4 : i32
    %18 = vector.broadcast %c4_i32 : i32 to vector<1x256xi32>
    %19 = arith.cmpi slt, %6, %18 : vector<1x256xi32>
    %20 = arith.andi %17, %19 : vector<1x256xi1>
    %c-1_i32 = arith.constant -1 : i32
    %21 = vector.broadcast %c-1_i32 : i32 to vector<1x256xi32>
    %22 = arith.select %20, %6, %21 : vector<1x256xi1>, vector<1x256xi32>
    %c0_i32_8 = arith.constant 0 : i32
    %23 = vector.broadcast %c0_i32_8 : i32 to vector<1x256xi32>
    %24 = arith.cmpi sge, %22, %23 : vector<1x256xi32>
    %25 = tpu.iota {dimensions = array<i32: 0>} : vector<4x256xi32>
    %26 = vector.broadcast %22 : vector<1x256xi32> to vector<4x256xi32>
    %27 = arith.cmpi eq, %26, %25 : vector<4x256xi32>
    %28 = arith.extui %27 : vector<4x256xi1> to vector<4x256xi32>
    %29 = arith.sitofp %28 : vector<4x256xi32> to vector<4x256xf32>
    %cst = arith.constant 0.000000e+00 : f32
    %30 = vector.broadcast %cst : f32 to vector<4x256xf32>
    %31 = arith.select %27, %4, %30 : vector<4x256xi1>, vector<4x256xf32>
    %cst_9 = arith.constant dense<0.000000e+00> : vector<256xf32>
    %32 = vector.multi_reduction <add>, %31, %cst_9 [0] : vector<4x256xf32> to vector<256xf32>
    %33 = vector.shape_cast %32 : vector<256xf32> to vector<1x256xf32>
    %cst_10 = arith.constant dense<0xFF800000> : vector<256xf32>
    %34 = vector.multi_reduction <maximumf>, %4, %cst_10 [0] : vector<4x256xf32> to vector<256xf32>
    %35 = vector.shape_cast %34 : vector<256xf32> to vector<1x256xf32>
    %36 = vector.broadcast %35 : vector<1x256xf32> to vector<4x256xf32>
    %37 = arith.subf %4, %36 : vector<4x256xf32>
    %38 = math.exp %37 : vector<4x256xf32>
    %cst_11 = arith.constant dense<0.000000e+00> : vector<256xf32>
    %39 = vector.multi_reduction <add>, %38, %cst_11 [0] : vector<4x256xf32> to vector<256xf32>
    %40 = vector.shape_cast %39 : vector<256xf32> to vector<1x256xf32>
    %41 = arith.subf %33, %35 : vector<1x256xf32>
    %42 = math.log %40 : vector<1x256xf32>
    %43 = arith.subf %41, %42 : vector<1x256xf32>
    %cst_12 = arith.constant 0.000000e+00 : f32
    %44 = vector.broadcast %cst_12 : f32 to vector<1x256xf32>
    %45 = arith.select %24, %43, %44 : vector<1x256xi1>, vector<1x256xf32>
    %c0_13 = arith.constant 0 : index
    %c0_14 = arith.constant 0 : index
    %c0_15 = arith.constant 0 : index
    %c0_16 = arith.constant 0 : index
    %46 = vector.load %arg5[%c0_13, %c0_14, %c0_15, %c0_16] : memref<1x1x4x1xf32, #tpu.memory_space<vmem>>, vector<1x1x4x1xf32>
    %cst_17 = arith.constant dense<0.000000e+00> : vector<4xf32>
    %47 = vector.multi_reduction <add>, %29, %cst_17 [1] : vector<4x256xf32> to vector<4xf32>
    %48 = vector.shape_cast %47 : vector<4xf32> to vector<4x1xf32>
    %49 = vector.shape_cast %48 : vector<4x1xf32> to vector<1x1x4x1xf32>
    %50 = arith.addf %46, %49 : vector<1x1x4x1xf32>
    %c0_18 = arith.constant 0 : index
    %c0_19 = arith.constant 0 : index
    %c0_20 = arith.constant 0 : index
    %c0_21 = arith.constant 0 : index
    %51 = vector.load %arg5[%c0_18, %c0_19, %c0_20, %c0_21] : memref<1x1x4x1xf32, #tpu.memory_space<vmem>>, vector<1x1x4x1xf32>
    tpu.vector_store %arg5[%c0_18, %c0_19, %c0_20, %c0_21], %50 {strides = array<i32>} : memref<1x1x4x1xf32, #tpu.memory_space<vmem>>, vector<1x1x4x1xf32>,
    %c0_22 = arith.constant 0 : index
    %c0_23 = arith.constant 0 : index
    %c0_24 = arith.constant 0 : index
    %c0_25 = arith.constant 0 : index
    %52 = vector.load %arg6[%c0_22, %c0_23, %c0_24, %c0_25] : memref<1x1x4x1xf32, #tpu.memory_space<vmem>>, vector<1x1x4x1xf32>
    %53 = vector.broadcast %45 : vector<1x256xf32> to vector<4x256xf32>
    %54 = arith.mulf %29, %53 : vector<4x256xf32>
    %cst_26 = arith.constant dense<0.000000e+00> : vector<4xf32>
    %55 = vector.multi_reduction <add>, %54, %cst_26 [1] : vector<4x256xf32> to vector<4xf32>
    %56 = vector.shape_cast %55 : vector<4xf32> to vector<4x1xf32>
    %57 = vector.shape_cast %56 : vector<4x1xf32> to vector<1x1x4x1xf32>
    %58 = arith.addf %52, %57 : vector<1x1x4x1xf32>
    %c0_27 = arith.constant 0 : index
    %c0_28 = arith.constant 0 : index
    %c0_29 = arith.constant 0 : index
    %c0_30 = arith.constant 0 : index
    %59 = vector.load %arg6[%c0_27, %c0_28, %c0_29, %c0_30] : memref<1x1x4x1xf32, #tpu.memory_space<vmem>>, vector<1x1x4x1xf32>
    tpu.vector_store %arg6[%c0_27, %c0_28, %c0_29, %c0_30], %58 {strides = array<i32>} : memref<1x1x4x1xf32, #tpu.memory_space<vmem>>, vector<1x1x4x1xf32>,
    return
  }
  func.func @transform_0(%arg0: i32, %arg1: i32, %arg2: i32) -> (i32, i32, i32) {
    %c1_i32 = arith.constant 1 : i32
    %0 = arith.muli %arg1, %c1_i32 : i32
    %1 = arith.addi %0, %arg2 : i32
    %c0_i32 = arith.constant 0 : i32
    %2 = arith.minsi %1, %c0_i32 : i32
    %c0_i32_0 = arith.constant 0 : i32
    %c0_i32_1 = arith.constant 0 : i32
    return %arg0, %c0_i32_0, %2 : i32, i32, i32
  }
  func.func @transform_1(%arg0: i32, %arg1: i32, %arg2: i32) -> (i32, i32, i32) {
    %c1_i32 = arith.constant 1 : i32
    %0 = arith.muli %arg1, %c1_i32 : i32
    %1 = arith.addi %0, %arg2 : i32
    %c0_i32 = arith.constant 0 : i32
    %2 = arith.minsi %1, %c0_i32 : i32
    %c0_i32_0 = arith.constant 0 : i32
    %c0_i32_1 = arith.constant 0 : i32
    return %arg0, %c0_i32_0, %2 : i32, i32, i32
  }
  func.func @transform_2(%arg0: i32, %arg1: i32, %arg2: i32) -> (i32, i32, i32, i32) {
    %c0_i32 = arith.constant 0 : i32
    %c0_i32_0 = arith.constant 0 : i32
    %c0_i32_1 = arith.constant 0 : i32
    return %arg0, %arg1, %c0_i32, %c0_i32_0 : i32, i32, i32, i32
  }
  func.func @transform_3(%arg0: i32, %arg1: i32, %arg2: i32) -> (i32, i32, i32, i32) {
    %c0_i32 = arith.constant 0 : i32
    %c0_i32_0 = arith.constant 0 : i32
    %c0_i32_1 = arith.constant 0 : i32
    return %arg0, %arg1, %c0_i32, %c0_i32_0 : i32, i32, i32, i32
  }
}

</mosaic_0001>

<llo_original>
// kernel: tpu_custom_call.1
$region0: #{tpu_custom_call.1}
  #allocation0 [shape = 'u32[]', space=smem, size = 0x4, offset = 0x4, fixed_abs, tag = 'smem constant byte address 0x4 - core index']
  #allocation1 [shape = 'u32[72,128]{1,0:T(1,128)}', space=vmem, size = 0x9000, scoped, tag = 'internal scratch']
  %s0 = inlined_call_operand.hbm [shape: f32[2,4,256], index: 0, kind: input, shape index: {}]
  %s1 = inlined_call_operand.hbm [shape: s32[2,1,256], index: 1, kind: input, shape index: {}]
  %s2 = inlined_call_operand.vmem [shape: f32[2,1,4,1], index: 2, kind: output, shape index: {0}]
  %s3 = inlined_call_operand.vmem [shape: f32[2,1,4,1], index: 3, kind: output, shape index: {1}]
  %4 = xla_tuple %s2, %s3
  %s5 = sld [smem:[#allocation0]]
  $region61: #{tpu_custom_call.1} parent=0
    _
  %s7 = ssub.s32 1, %s5
  %s8 = scalar_select 0, %s7, %s5
  $region1: #{tpu_custom_call.1} parent=0
    #allocation2 [shape = 'u8[8192]{0}', space=vmem, size = 0x2000, scoped, tag = 'input window, operand 0']
    #allocation3 [shape = 's32[2]{0}', space=sflag, size = 0x8, scoped, tag = 'scoped memory for tpu_custom_call.1']
    #allocation4 [shape = 'u8[2048]{0}', space=vmem, size = 0x800, scoped, tag = 'input window, operand 1']
    #allocation5 [shape = 's32[2]{0}', space=sflag, size = 0x8, scoped, tag = 'scoped memory for tpu_custom_call.1']
    %9 = vsyncpa [#allocation3], 0
    %s10 = scalar_lea.sflag [#allocation3], 1
    %11 = vsyncpa %s10, 0
    %12 = vsyncpa [#allocation5], 0
    %s13 = scalar_lea.sflag [#allocation5], 1
    %14 = vsyncpa %s13, 0
    loop: start=0, step=1, limit=4
    $region2: #{tpu_custom_call.1} parent=1 // loop_pre_header
      _
    $region3: #{tpu_custom_call.1} parent=1 // loop_header
      %s16 = sphi 0, %s20
      %p17 = scmp.ge.s32.totalorder %s16, 4
      %s23 = sphi 0, %s42
      %s24 = sphi 0, %s38
      %s25 = sphi 0, %s34
      %s26 = sphi 0, %s23
      %s27 = sphi 0, %s24
      %s28 = sphi 0, %s25
      %s29 = sphi 0, %s26
      %s30 = sphi 0, %s27
      %s31 = sphi 0, %s28
      %s53 = sphi 0, %s55
      %s56 = sphi 0, %s53
      %s57 = sphi 0, %s56
      %s73 = sphi 0, %s57
      %s87 = sphi 0, %s89
      %s90 = sphi 0, %s87
      %s91 = sphi 0, %s90
      %s107 = sphi 0, %s91
      %s115 = sphi 0, %s117
      %s118 = sphi 0, %s115
      %s119 = sphi 0, %s118
      %s135 = sphi 0, %s119
      %s143 = sphi 0, %s145
      %s146 = sphi 0, %s143
      %s147 = sphi 0, %s146
      %s163 = sphi 0, %s147
    $region4: #{tpu_custom_call.1} parent=1 // loop_header_branch
      %19 = sbr.rel (%p17) target = $region8
    $region5: #{tpu_custom_call.1} parent=1 // loop_body
      %s21 = ssub.s32 %s16, 1
      %s22 = ssub.s32 %s16, 2
      %s32 = sadd.s32 1, %s25
      %p33 = scmp.ge.s32.totalorder %s32, 1
      %s34 = scalar_select %p33, 0, %s32
      %s35 = sadd.s32 1, %s24
      %s36 = scalar_select %p33, %s35, %s24
      %p37 = scmp.ge.s32.totalorder %s36, 1
      %s38 = scalar_select %p37, 0, %s36
      %s39 = sadd.s32 1, %s23
      %s40 = scalar_select %p37, %s39, %s23
      %p41 = scmp.ge.s32.totalorder %s40, 2
      %s42 = scalar_select %p41, 0, %s40
      %s43 = sadd.s32 %s24, %s25
      %p44 = scmp.lt.s32.totalorder %s43, 0
      %s45 = scalar_select %p44, %s43, 0
      %s46 = sadd.s32 %s38, %s34
      %p47 = scmp.lt.s32.totalorder %s46, 0
      %s48 = scalar_select %p47, %s46, 0
      %s49 = ssub.s32 %s23, %s42
      %s50 = ssub.s32 %s45, %s48
      %s51 = sor.u32 %s49, %s50
      %p52 = scmp.eq.s32.totalorder %s51, 0
      %s54 = sadd.s32 %s53, 1
      %s55 = scalar_select %p52, %s53, %s54
      %p58 = pneg %p52
      %p59 = scmp.eq.s32.totalorder %s16, 1
      %p60 = por %p58, %p59
      %p61 = scmp.ne.s32.totalorder %s53, %s56
      %p62 = scmp.eq.s32.totalorder %s16, 0
      %p63 = por %p61, %p62
      %p64 = scmp.ne.s32.totalorder %s53, %s56
      %p65 = scmp.eq.s32.totalorder %s21, 1
      %p66 = por %p64, %p65
      %p67 = scmp.ne.s32.totalorder %s56, %s57
      %p68 = scmp.eq.s32.totalorder %s21, 0
      %p69 = por %p67, %p68
      %p70 = scmp.ne.s32.totalorder %s56, %s57
      %p71 = scmp.eq.s32.totalorder %s22, 1
      %p72 = por %p70, %p71
      %p74 = scmp.ne.s32.totalorder %s57, %s73
      %p75 = scmp.eq.s32.totalorder %s22, 0
      %p76 = por %p74, %p75
      %s77 = sadd.s32 %s24, %s25
      %p78 = scmp.lt.s32.totalorder %s77, 0
      %s79 = scalar_select %p78, %s77, 0
      %s80 = sadd.s32 %s38, %s34
      %p81 = scmp.lt.s32.totalorder %s80, 0
      %s82 = scalar_select %p81, %s80, 0
      %s83 = ssub.s32 %s23, %s42
      %s84 = ssub.s32 %s79, %s82
      %s85 = sor.u32 %s83, %s84
      %p86 = scmp.eq.s32.totalorder %s85, 0
      %s88 = sadd.s32 %s87, 1
      %s89 = scalar_select %p86, %s87, %s88
      %p92 = pneg %p86
      %p93 = scmp.eq.s32.totalorder %s16, 1
      %p94 = por %p92, %p93
      %p95 = scmp.ne.s32.totalorder %s87, %s90
      %p96 = scmp.eq.s32.totalorder %s16, 0
      %p97 = por %p95, %p96
      %p98 = scmp.ne.s32.totalorder %s87, %s90
      %p99 = scmp.eq.s32.totalorder %s21, 1
      %p100 = por %p98, %p99
      %p101 = scmp.ne.s32.totalorder %s90, %s91
      %p102 = scmp.eq.s32.totalorder %s21, 0
      %p103 = por %p101, %p102
      %p104 = scmp.ne.s32.totalorder %s90, %s91
      %p105 = scmp.eq.s32.totalorder %s22, 1
      %p106 = por %p104, %p105
      %p108 = scmp.ne.s32.totalorder %s91, %s107
      %p109 = scmp.eq.s32.totalorder %s22, 0
      %p110 = por %p108, %p109
      %s111 = ssub.s32 %s23, %s42
      %s112 = ssub.s32 %s24, %s38
      %s113 = sor.u32 %s111, %s112
      %p114 = scmp.eq.s32.totalorder %s113, 0
      %s116 = sadd.s32 %s115, 1
      %s117 = scalar_select %p114, %s115, %s116
      %p120 = pneg %p114
      %p121 = scmp.eq.s32.totalorder %s16, 1
      %p122 = por %p120, %p121
      %p123 = scmp.ne.s32.totalorder %s115, %s118
      %p124 = scmp.eq.s32.totalorder %s16, 0
      %p125 = por %p123, %p124
      %p126 = scmp.ne.s32.totalorder %s115, %s118
      %p127 = scmp.eq.s32.totalorder %s21, 1
      %p128 = por %p126, %p127
      %p129 = scmp.ne.s32.totalorder %s118, %s119
      %p130 = scmp.eq.s32.totalorder %s21, 0
      %p131 = por %p129, %p130
      %p132 = scmp.ne.s32.totalorder %s118, %s119
      %p133 = scmp.eq.s32.totalorder %s22, 1
      %p134 = por %p132, %p133
      %p136 = scmp.ne.s32.totalorder %s119, %s135
      %p137 = scmp.eq.s32.totalorder %s22, 0
      %p138 = por %p136, %p137
      %s139 = ssub.s32 %s23, %s42
      %s140 = ssub.s32 %s24, %s38
      %s141 = sor.u32 %s139, %s140
      %p142 = scmp.eq.s32.totalorder %s141, 0
      %s144 = sadd.s32 %s143, 1
      %s145 = scalar_select %p142, %s143, %s144
      %p148 = pneg %p142
      %p149 = scmp.eq.s32.totalorder %s16, 1
      %p150 = por %p148, %p149
      %p151 = scmp.ne.s32.totalorder %s143, %s146
      %p152 = scmp.eq.s32.totalorder %s16, 0
      %p153 = por %p151, %p152
      %p154 = scmp.ne.s32.totalorder %s143, %s146
      %p155 = scmp.eq.s32.totalorder %s21, 1
      %p156 = por %p154, %p155
      %p157 = scmp.ne.s32.totalorder %s146, %s147
      %p158 = scmp.eq.s32.totalorder %s21, 0
      %p159 = por %p157, %p158
      %p160 = scmp.ne.s32.totalorder %s146, %s147
      %p161 = scmp.eq.s32.totalorder %s22, 1
      %p162 = por %p160, %p161
      %p164 = scmp.ne.s32.totalorder %s147, %s163
      %p165 = scmp.eq.s32.totalorder %s22, 0
      %p166 = por %p164, %p165
      %p167 = scmp.le.s32.totalorder 1, %s16
      %p168 = scmp.lt.s32.totalorder %s16, 3
      %p169 = pnand %p167, %p168
      %p170 = pneg %p169
      // Predicated region
      $region9: #{tpu_custom_call.1} parent=5 // pred_check
        _
      $region10: #{tpu_custom_call.1} parent=5 // pred_check_branch
        %172 = sbr.rel (%p169) target = $region12
      $region11: #{tpu_custom_call.1} parent=5 // pred_region
        %s173 = ssub.s32 %s16, 1
      $region12: #{tpu_custom_call.1} parent=5 // pred_fallthru
        _
      %p174 = scmp.lt.s32.totalorder %s16, 2
      // Predicated region
      $region13: #{tpu_custom_call.1} parent=5 // pred_check
        %p175 = pneg %p174
      $region14: #{tpu_custom_call.1} parent=5 // pred_check_branch
        %177 = sbr.rel (%p175) target = $region16
      $region15: #{tpu_custom_call.1} parent=5 // pred_region
        // Predicated region
        $region17: #{tpu_custom_call.1} parent=15 // pred_check
          %p178 = pneg %p63
        $region18: #{tpu_custom_call.1} parent=15 // pred_check_branch
          %180 = sbr.rel (%p178) target = $region20
        $region19: #{tpu_custom_call.1} parent=15 // pred_region
          %s181 = sand.u32 %s53, 1
          %s182 = scalar_lea.sflag [#allocation3], %s181
          %s183 = sand.u32 %s53, 1
          %s184 = smul.addr %s183, 8
          %s185 = scalar_lea.vmem [#allocation2], %s184
          %s186 = sadd.s32 %s24, %s25
          %p187 = scmp.lt.s32.totalorder %s186, 0
          %s188 = scalar_select %p187, %s186, 0
          %s189 = smul.u32 2, %s188
          %191 = vsyncadd %s182, 0
          %s192 = smul.addr %s23, 2
          %s193 = sadd.s32 %s189, %s192
          %s194 = smul.addr %s193, 4
          %s195 = scalar_lea.hbm %s0, %s194
          %s197 = sshll.u32 %s195, 4
          %s198 = int_to_ptr.hbm [resolvable:$true] %s197
          %s199 = sshll.u32 %s185, 4
          %s200 = int_to_ptr.vmem [resolvable:$true] %s199
          %202 = dma.hbm_to_vmem [thread:$0]  %s198, 128, %s200, %s182
        $region20: #{tpu_custom_call.1} parent=15 // pred_fallthru
          _
        // Predicated region
        $region21: #{tpu_custom_call.1} parent=15 // pred_check
          %p203 = pneg %p97
        $region22: #{tpu_custom_call.1} parent=15 // pred_check_branch
          %205 = sbr.rel (%p203) target = $region24
        $region23: #{tpu_custom_call.1} parent=15 // pred_region
          %s206 = sand.u32 %s87, 1
          %s207 = scalar_lea.sflag [#allocation5], %s206
          %s208 = sand.u32 %s87, 1
          %s209 = smul.addr %s208, 2
          %s210 = scalar_lea.vmem [#allocation4], %s209
          %s211 = sadd.s32 %s24, %s25
          %p212 = scmp.lt.s32.totalorder %s211, 0
          %s213 = scalar_select %p212, %s211, 0
          %s214 = smul.u32 2, %s213
          %216 = vsyncadd %s207, 0
          %s217 = smul.addr %s23, 2
          %s218 = sadd.s32 %s214, %s217
          %s219 = scalar_lea.hbm %s1, %s218
          %s221 = sshll.u32 %s219, 4
          %s222 = int_to_ptr.hbm [resolvable:$true] %s221
          %s223 = sshll.u32 %s210, 4
          %s224 = int_to_ptr.vmem [resolvable:$true] %s223
          %226 = dma.hbm_to_vmem [thread:$0]  %s222, 32, %s224, %s207
        $region24: #{tpu_custom_call.1} parent=15 // pred_fallthru
          _
      $region16: #{tpu_custom_call.1} parent=5 // pred_fallthru
        _
      %p227 = scmp.le.s32.totalorder 1, %s16
      %p228 = scmp.lt.s32.totalorder %s16, 3
      %p229 = pnand %p227, %p228
      %p230 = pneg %p229
      // Predicated region
      $region25: #{tpu_custom_call.1} parent=5 // pred_check
        _
      $region26: #{tpu_custom_call.1} parent=5 // pred_check_branch
        %232 = sbr.rel (%p229) target = $region28
      $region27: #{tpu_custom_call.1} parent=5 // pred_region
        %s233 = ssub.s32 %s16, 1
        %s234 = sand.u32 %s56, 1
        %s235 = scalar_lea.sflag [#allocation3], %s234
        %s236 = sand.u32 %s56, 1
        %s237 = smul.addr %s236, 8
        %s238 = scalar_lea.vmem [#allocation2], %s237
        // Predicated region
        $region29: #{tpu_custom_call.1} parent=27 // pred_check
          %p239 = pneg %p69
        $region30: #{tpu_custom_call.1} parent=27 // pred_check_branch
          %241 = sbr.rel (%p239) target = $region32
        $region31: #{tpu_custom_call.1} parent=27 // pred_region
          %243 = dma.done %s235, 128
        $region32: #{tpu_custom_call.1} parent=27 // pred_fallthru
          _
        %s244 = sand.u32 %s90, 1
        %s245 = scalar_lea.sflag [#allocation5], %s244
        %s246 = sand.u32 %s90, 1
        %s247 = smul.addr %s246, 2
        %s248 = scalar_lea.vmem [#allocation4], %s247
        // Predicated region
        $region33: #{tpu_custom_call.1} parent=27 // pred_check
          %p249 = pneg %p103
        $region34: #{tpu_custom_call.1} parent=27 // pred_check_branch
          %251 = sbr.rel (%p249) target = $region36
        $region35: #{tpu_custom_call.1} parent=27 // pred_region
          %253 = dma.done %s245, 32
        $region36: #{tpu_custom_call.1} parent=27 // pred_fallthru
          _
        %s254 = sand.u32 %s56, 1
        %s255 = scalar_lea.sflag [#allocation3], %s254
        %s256 = sand.u32 %s56, 1
        %s257 = smul.addr %s256, 8
        %s258 = scalar_lea.vmem [#allocation2], %s257
        %p259 = pneg %p69
        %p260 = pneg %p66
        %s261 = sand.u32 %s90, 1
        %s262 = scalar_lea.sflag [#allocation5], %s261
        %s263 = sand.u32 %s90, 1
        %s264 = smul.addr %s263, 2
        %s265 = scalar_lea.vmem [#allocation4], %s264
        %p266 = pneg %p103
        %p267 = pneg %p100
        %p268 = pneg %p131
        %p269 = pneg %p128
        %p270 = scmp.lt.s32.totalorder %s26, 1
        %s271 = scalar_select %p270, %s26, 1
        %p272 = scmp.lt.s32.totalorder %s27, 0
        %s273 = scalar_select %p272, %s27, 0
        %s274 = sadd.s32 %s273, %s271
        %s275 = smul.addr %s274, 4
        %s276 = scalar_lea.vmem %s2, %s275
        %p277 = pneg %p159
        %p278 = pneg %p156
        %p279 = scmp.lt.s32.totalorder %s26, 1
        %s280 = scalar_select %p279, %s26, 1
        %p281 = scmp.lt.s32.totalorder %s27, 0
        %s282 = scalar_select %p281, %s27, 0
        %s283 = sadd.s32 %s282, %s280
        %s284 = smul.addr %s283, 4
        %s285 = scalar_lea.vmem %s3, %s284
        %s286 = sadd.s32 %s27, %s28
        %p287 = scmp.lt.s32.totalorder %s286, 0
        %s288 = scalar_select %p287, %s286, 0
        %s289 = smul.u32 2, %s288
        %s290 = sadd.s32 %s27, %s28
        %p291 = scmp.lt.s32.totalorder %s290, 0
        %s292 = scalar_select %p291, %s290, 0
        %s293 = smul.u32 2, %s292
        %p294 = scmp.lt.s32.totalorder %s26, 1
        %s295 = scalar_select %p294, %s26, 1
        %p296 = scmp.lt.s32.totalorder %s27, 0
        %s297 = scalar_select %p296, %s27, 0
        %s298 = sadd.s32 %s297, %s295
        %s299 = smul.addr %s298, 4
        %s300 = scalar_lea.vmem %s2, %s299
        %p301 = scmp.lt.s32.totalorder %s26, 1
        %s302 = scalar_select %p301, %s26, 1
        %p303 = scmp.lt.s32.totalorder %s27, 0
        %s304 = scalar_select %p303, %s27, 0
        %s305 = sadd.s32 %s304, %s302
        %s306 = smul.addr %s305, 4
        %s307 = scalar_lea.vmem %s3, %s306
        %p308 = scmp.eq.s32.totalorder %s28, 0
        // Predicated region
        $region37: #{tpu_custom_call.1} parent=27 // pred_check
          %p309 = pneg %p308
        $region38: #{tpu_custom_call.1} parent=27 // pred_check_branch
          %311 = sbr.rel (%p309) target = $region40
        $region39: #{tpu_custom_call.1} parent=27 // pred_region
          %vm312 = vcmask 3072
          %313 = vst.msk [vmem:[%s300] sm:$0xf] %vm312, 0.0
          %314 = vst.msk [vmem:[%s307] sm:$0xf] %vm312, 0.0
        $region40: #{tpu_custom_call.1} parent=27 // pred_fallthru
          _
        %v315 = vld [vmem:[%s238] sm:$0xff]
        %v316 = vld [vmem:[%s248] sm:$0x3]
        %s317 = sadd.s32 %s27, %s28
        %s318 = smul.u32 %s317, 256
        %v319 = vlaneseq
        %v320 = vand.u32 %v319, 127
        %v321 = vadd.s32 %v320, 128
        %v322 = vstv %s318
        %v323 = vadd.s32 %v322, %v320
        %v324 = vadd.s32 %v322, %v321
        %vm325 = vcmp.lt.s32.totalorder %v323, 256
        %vm326 = vcmp.lt.s32.totalorder %v324, 256
        %vm327 = vcmp.ge.s32.totalorder %v316, 0
        %v328 = vsel %vm327, 1, 0
        %v329 = vperm.slane %v328, 0
        %v330 = vperm.slane %v328, 1
        %vm331 = vcmp.ne.s32.totalorder %v329, 0
        %vm332 = vcmp.ne.s32.totalorder %v330, 0
        %vm333 = vmand %vm325, %vm331
        %vm334 = vmand %vm326, %vm332
        %vm335 = vcmp.lt.s32.totalorder %v316, 4
        %v336 = vsel %vm335, 1, 0
        %v337 = vperm.slane %v336, 0
        %v338 = vperm.slane %v336, 1
        %vm339 = vcmp.ne.s32.totalorder %v337, 0
        %vm340 = vcmp.ne.s32.totalorder %v338, 0
        %vm341 = vmand %vm333, %vm339
        %vm342 = vmand %vm334, %vm340
        %v343 = vperm.slane %v316, 0
        %v344 = vperm.slane %v316, 1
        %v345 = vsel %vm341, %v343, 4294967295
        %v346 = vsel %vm342, %v344, 4294967295
        %vm347 = vcmp.ge.s32.totalorder %v345, 0
        %vm348 = vcmp.ge.s32.totalorder %v346, 0
        %v349 = vlaneseq
        %v350 = vshrl.u32 %v349, 7
        %v351 = vperm.slane %v345, 0
        %v352 = vperm.slane %v346, 0
        %vm353 = vcmp.eq.s32.totalorder %v351, %v350
        %vm354 = vcmp.eq.s32.totalorder %v352, %v350
        %v355 = vsel %vm353, 1, 0
        %v356 = vsel %vm354, 1, 0
        %v357 = vcvt.s32.f32 %v355
        %v358 = vcvt.s32.f32 %v356
        %360 = vst [vmem:[#allocation1] ss:$2 sm:$0xff] %v315
        %v361 = vld.sshfl [vmem:[#allocation1] sm:$0xff pattern:$0x75316420]
        %v362 = vld.sshfl [vmem:[#allocation1 + $0x8] sm:$0xff pattern:$0x75316420]
        %v365 = vsel %vm353, %v361, 0.0
        %v366 = vsel %vm354, %v362, 0.0
        %vm367 = vcmask 1043456
        %v368 = vsel %vm367, %v365, 0.0
        %v369 = vrot.slane %v368, 4
        %v370 = vadd.f32 %v368, %v369
        %v371 = vrot.slane %v370, 2
        %v372 = vadd.f32 %v370, %v371
        %v373 = vrot.slane %v372, 1
        %v374 = vadd.f32 %v372, %v373
        %v375 = vsel %vm367, %v366, 0.0
        %v376 = vrot.slane %v375, 4
        %v377 = vadd.f32 %v375, %v376
        %v378 = vrot.slane %v377, 2
        %v379 = vadd.f32 %v377, %v378
        %v380 = vrot.slane %v379, 1
        %v381 = vadd.f32 %v379, %v380
        %382 = vst [vmem:[#allocation1] ss:$2 sm:$0xff] %v315
        %v383 = vld.sshfl [vmem:[#allocation1] sm:$0xff pattern:$0x75316420]
        %v384 = vld.sshfl [vmem:[#allocation1 + $0x8] sm:$0xff pattern:$0x75316420]
        %v387 = vsel %vm367, %v383, -inf
        %v388 = vrot.slane %v387, 4
        %v389 = vmax.f32 %v387, %v388
        %v390 = vrot.slane %v389, 2
        %v391 = vmax.f32 %v389, %v390
        %v392 = vrot.slane %v391, 1
        %v393 = vmax.f32 %v391, %v392
        %v394 = vsel %vm367, %v384, -inf
        %v395 = vrot.slane %v394, 4
        %v396 = vmax.f32 %v394, %v395
        %v397 = vrot.slane %v396, 2
        %v398 = vmax.f32 %v396, %v397
        %v399 = vrot.slane %v398, 1
        %v400 = vmax.f32 %v398, %v399
        %v403 = vrot.slane %v400, 4
        %v404 = vsel %vm367, %v393, %v403
        %v406 = vsub.f32 %v315, %v404
        %v407 = vmul.f32 %v406, 1.442695
        %v408 = vpow.pop %v407
        %410 = vst [vmem:[#allocation1] ss:$2 sm:$0xff] %v408
        %v411 = vld.sshfl [vmem:[#allocation1] sm:$0xff pattern:$0x75316420]
        %v412 = vld.sshfl [vmem:[#allocation1 + $0x8] sm:$0xff pattern:$0x75316420]
        %v415 = vsel %vm367, %v411, 0.0
        %v416 = vrot.slane %v415, 4
        %v417 = vadd.f32 %v415, %v416
        %v418 = vrot.slane %v417, 2
        %v419 = vadd.f32 %v417, %v418
        %v420 = vrot.slane %v419, 1
        %v421 = vadd.f32 %v419, %v420
        %v422 = vsel %vm367, %v412, 0.0
        %v423 = vrot.slane %v422, 4
        %v424 = vadd.f32 %v422, %v423
        %v425 = vrot.slane %v424, 2
        %v426 = vadd.f32 %v424, %v425
        %v427 = vrot.slane %v426, 1
        %v428 = vadd.f32 %v426, %v427
        %v429 = vsub.f32 %v374, %v393
        %v430 = vsub.f32 %v381, %v400
        %v431 = vlog2.pop %v421
        %v432 = vmul.f32 %v431, 0.6931472
        %v433 = vlog2.pop %v428
        %v434 = vmul.f32 %v433, 0.6931472
        %v435 = vsub.f32 %v429, %v432
        %v436 = vsub.f32 %v430, %v434
        %v437 = vsel %vm347, %v435, 0.0
        %v438 = vsel %vm348, %v436, 0.0
        %v439 = vld [vmem:[%s300] sm:$0xf]
        %v440 = vsel %vm367, %v357, 0.0
        %v441 = vsel %vm367, %v358, 0.0
        %v442 = vadd.f32 %v440, %v441
        %443 = vadd.xlane.f32.xlu0 %v442
        %v444 = vpop.xlane.xlu0 %443
        %v445 = vadd.f32 %v439, %v444
        %vm446 = vcmask 3072
        %447 = vst.msk [vmem:[%s300] sm:$0xf] %vm446, %v445
        %v448 = vld [vmem:[%s307] sm:$0xf]
        %v449 = vperm.slane %v437, 0
        %v450 = vperm.slane %v438, 0
        %v451 = vmul.f32 %v357, %v449
        %v452 = vmul.f32 %v358, %v450
        %v453 = vsel %vm367, %v451, 0.0
        %v454 = vsel %vm367, %v452, 0.0
        %v455 = vadd.f32 %v453, %v454
        %456 = vadd.xlane.f32.xlu0 %v455
        %v457 = vpop.xlane.xlu0 %456
        %v458 = vadd.f32 %v448, %v457
        %459 = vst.msk [vmem:[%s307] sm:$0xf] %vm446, %v458
        %p460 = scmp.lt.s32.totalorder %s26, 1
        %s461 = scalar_select %p460, %s26, 1
        %p462 = scmp.lt.s32.totalorder %s27, 0
        %s463 = scalar_select %p462, %s27, 0
        %s464 = sadd.s32 %s463, %s461
        %s465 = smul.addr %s464, 4
        %s466 = scalar_lea.vmem %s2, %s465
        %p467 = scmp.lt.s32.totalorder %s26, 1
        %s468 = scalar_select %p467, %s26, 1
        %p469 = scmp.lt.s32.totalorder %s27, 0
        %s470 = scalar_select %p469, %s27, 0
        %s471 = sadd.s32 %s470, %s468
        %s472 = smul.addr %s471, 4
        %s473 = scalar_lea.vmem %s3, %s472
        // Predicated region
        $region41: #{tpu_custom_call.1} parent=27 // pred_check
          %p474 = pneg %p128
        $region42: #{tpu_custom_call.1} parent=27 // pred_check_branch
          %476 = sbr.rel (%p474) target = $region44
        $region43: #{tpu_custom_call.1} parent=27 // pred_region
          _
        $region44: #{tpu_custom_call.1} parent=27 // pred_fallthru
          _
        // Predicated region
        $region45: #{tpu_custom_call.1} parent=27 // pred_check
          %p477 = pneg %p156
        $region46: #{tpu_custom_call.1} parent=27 // pred_check_branch
          %479 = sbr.rel (%p477) target = $region48
        $region47: #{tpu_custom_call.1} parent=27 // pred_region
          _
        $region48: #{tpu_custom_call.1} parent=27 // pred_fallthru
          _
      $region28: #{tpu_custom_call.1} parent=5 // pred_fallthru
        _
      %p480 = scmp.le.s32.totalorder 2, %s16
      // Predicated region
      $region49: #{tpu_custom_call.1} parent=5 // pred_check
        %p481 = pneg %p480
      $region50: #{tpu_custom_call.1} parent=5 // pred_check_branch
        %483 = sbr.rel (%p481) target = $region52
      $region51: #{tpu_custom_call.1} parent=5 // pred_region
        %s484 = ssub.s32 %s16, 2
        // Predicated region
        $region53: #{tpu_custom_call.1} parent=51 // pred_check
          %p485 = pneg %p134
        $region54: #{tpu_custom_call.1} parent=51 // pred_check_branch
          %487 = sbr.rel (%p485) target = $region56
        $region55: #{tpu_custom_call.1} parent=51 // pred_region
          %p488 = scmp.lt.s32.totalorder %s29, 1
          %s489 = scalar_select %p488, %s29, 1
          %p490 = scmp.lt.s32.totalorder %s30, 0
          %s491 = scalar_select %p490, %s30, 0
          %s492 = sadd.s32 %s491, %s489
          %s493 = smul.addr %s492, 4
          %s494 = scalar_lea.vmem %s2, %s493
        $region56: #{tpu_custom_call.1} parent=51 // pred_fallthru
          _
        // Predicated region
        $region57: #{tpu_custom_call.1} parent=51 // pred_check
          %p495 = pneg %p162
        $region58: #{tpu_custom_call.1} parent=51 // pred_check_branch
          %497 = sbr.rel (%p495) target = $region60
        $region59: #{tpu_custom_call.1} parent=51 // pred_region
          %p498 = scmp.lt.s32.totalorder %s29, 1
          %s499 = scalar_select %p498, %s29, 1
          %p500 = scmp.lt.s32.totalorder %s30, 0
          %s501 = scalar_select %p500, %s30, 0
          %s502 = sadd.s32 %s501, %s499
          %s503 = smul.addr %s502, 4
          %s504 = scalar_lea.vmem %s3, %s503
        $region60: #{tpu_custom_call.1} parent=51 // pred_fallthru
          _
      $region52: #{tpu_custom_call.1} parent=5 // pred_fallthru
        _
    $region6: #{tpu_custom_call.1} parent=1 // loop_footer
      %s20 = sadd.s32 1, %s16
    $region7: #{tpu_custom_call.1} parent=1 // loop_footer_branch
      %15 = sbr.rel target = $region3
    $region8: #{tpu_custom_call.1} parent=1 // loop_exit
      _
    %505 = vsyncpa [#allocation3], 1
    %s506 = scalar_lea.sflag [#allocation3], 1
    %507 = vsyncpa %s506, 1
    %508 = vsyncpa [#allocation5], 1
    %s509 = scalar_lea.sflag [#allocation5], 1
    %510 = vsyncpa %s509, 1

</llo_original>
